<compile_context>
chip_gen: v5e
topology: v5e:2x2
jax: 0.10.0
libtpu: 0.0.40
codegen_flags: <defaults>
</compile_context>

<pallas_src>
import jax
import jax.numpy as jnp
from jax.experimental import pallas as pl
from jax.experimental.pallas import tpu as pltpu

_LANE = 128
_COLS_CAP = 16384                    # widest lane-dense column width searched
_TILE_BYTES_TARGET = 4 * 1024 * 1024 # ~4 MiB / tile: 86%+ of HBM roofline,
                                     # 4 buffers (in+out, double-buffered)
                                     # = ~16 MiB resident on every generation
_VMEM_LIMIT_BYTES = 48 * 1024 * 1024 # explicit scoped-VMEM cap: headroom under
                                     # v7x's 64 MiB physical, safe on v5e/v6e
# Dtype-aware sublane floor (packed vreg granularity).
_SUBLANE_FLOOR = {1: 32, 2: 16, 4: 8, 8: 8}


def _identity_copy_kernel(x_ref, o_ref):
    # Pure streaming copy: one tile-wide load + one unmasked, lane-dense store.
    o_ref[...] = x_ref[...]


def _ceil_to(a, b):
    return -(-a // b) * b


def _copy_plan(total_elems, itemsize):
    """Pick (cols, rows, row_tile, grid_len) for a lane-dense 2-D copy view.

    cols      : power-of-two multiple of 128 (lane-dense), as wide as useful.
    rows      : ceil(total/cols)  -> flat array is padded up to rows*cols.
    row_tile  : multiple of the dtype sublane floor sized to ~4 MiB per tile,
                or the full row extent for tiny inputs.
    grid_len  : ceil(rows/row_tile); Pallas masks the final partial block.
    """
    sub = _SUBLANE_FLOOR.get(itemsize, 8)
    tile_elems_target = _TILE_BYTES_TARGET // itemsize

    # Lane-dense width: widest power-of-two multiple of 128 that does not
    # exceed the (tiny-input-clamped) cap.
    cols = _LANE
    width_cap = min(max(total_elems, _LANE), _COLS_CAP)
    while cols * 2 <= width_cap:
        cols *= 2

    rows = _ceil_to(total_elems, cols) // cols

    # Row tile: multiple of the sublane floor hitting the per-tile byte target.
    row_tile = max(sub, (tile_elems_target // cols) // sub * sub)

    if row_tile >= rows:
        # Whole tensor is (at most) one tile.  If there are enough rows, split
        # into two grid steps so both v7x TensorCores get work; otherwise use
        # the full row extent (always a legal block size).
        if rows > 2 * sub:
            row_tile = _ceil_to(-(-rows // 2), sub)
        else:
            row_tile = rows

    grid_len = -(-rows // row_tile)
    return cols, rows, row_tile, grid_len


def identity_copy(x):
    """Materializing identity: tiled, lane-dense VMEM streaming copy."""
    total = x.size
    if total == 0:
        return x

    itemsize = jnp.dtype(x.dtype).itemsize
    cols, rows, row_tile, grid_len = _copy_plan(total, itemsize)

    flat = x.reshape(-1)
    padded_total = rows * cols
    if padded_total != total:
        # Pad-to-lane fallback: < one row (<= 64 KiB) of extra traffic keeps
        # every shape on the lane-dense, pipelined path.
        flat = jnp.pad(flat, (0, padded_total - total))
    x2d = flat.reshape(rows, cols)

    spec = pl.BlockSpec((row_tile, cols), lambda i: (i, 0))
    y2d = pl.pallas_call(
        _identity_copy_kernel,
        out_shape=jax.ShapeDtypeStruct((rows, cols), x.dtype),
        grid=(grid_len,),
        in_specs=[spec],
        out_specs=spec,
        compiler_params=pltpu.CompilerParams(
            dimension_semantics=("parallel",),
            vmem_limit_bytes=_VMEM_LIMIT_BYTES,
        ),
    )(x2d)

    out_flat = y2d.reshape(-1)
    if padded_total != total:
        out_flat = out_flat[:total]
    return out_flat.reshape(x.shape)


def print_shape_forward(x, *, force_copy=False):
    """Forward pass of `print_shape`.

    Prints the shape (matching `print(x.shape)`; fires at trace time under
    jit) and returns x.  Default path is the zero-cost identity; set
    `force_copy=True` to route the data through the Pallas copy kernel.
    """
    # TODO(synk): under jit this prints once per compilation (trace time), not
    # once per forward call as in PyTorch eager.
    print(tuple(x.shape))
    if not force_copy:
        return x
    return identity_copy(x)


if __name__ == "__main__":
    key = jax.random.PRNGKey(0)
    # Small NCHW input consistent with a conv-style model: (N=2, C=4, H=16, W=16).
    x = jax.random.normal(key, (2, 4, 16, 16), dtype=jnp.float32)

    # Fast path: pure identity, no kernel launched (primary optimization).
    y_fast = print_shape_forward(x)
    assert y_fast is x

    # Kernel path: tiled, lane-dense Pallas streaming copy.
    y = print_shape_forward(x, force_copy=True)
    y = jax.block_until_ready(y)
    assert y.shape == x.shape and y.dtype == x.dtype
    assert bool(jnp.all(y == x))

    # Robustness: odd element count (exercises the pad-to-lane path).
    x_odd = jax.random.normal(jax.random.PRNGKey(0), (2, 3, 5, 7), dtype=jnp.float32)
    y_odd = jax.block_until_ready(identity_copy(x_odd))
    assert y_odd.shape == x_odd.shape and bool(jnp.all(y_odd == x_odd))

    # Robustness: bf16 (16-sublane floor path).
    x_bf16 = x.astype(jnp.bfloat16)
    y_bf16 = jax.block_until_ready(identity_copy(x_bf16))
    assert y_bf16.dtype == jnp.bfloat16 and bool(jnp.all(y_bf16 == x_bf16))

    print("KERNEL_OK")
</pallas_src>

<mosaic_0001>
module attributes {stable_mosaic.version = 11 : i64} {
  func.func @_identity_copy_kernel(%arg0: i32, %arg1: memref<1x2048xf32, #tpu.memory_space<vmem>>, %arg2: memref<1x2048xf32, #tpu.memory_space<vmem>>) attributes {dimension_semantics = [#tpu.dimension_semantics<parallel>], iteration_bounds = array<i64: 1>, scalar_prefetch = 0 : i64, scratch_operands = 0 : i64, tpu.core_type = #tpu.core_type<tc>, window_params = [{transform_indices = @transform_0, window_bounds = array<i64: 1, 2048>}, {transform_indices = @transform_1, window_bounds = array<i64: 1, 2048>}]} {
    %c0 = arith.constant 0 : index
    %c0_0 = arith.constant 0 : index
    %0 = vector.load %arg1[%c0, %c0_0] : memref<1x2048xf32, #tpu.memory_space<vmem>>, vector<1x2048xf32>
    %c0_1 = arith.constant 0 : index
    %c0_2 = arith.constant 0 : index
    %1 = vector.load %arg2[%c0_1, %c0_2] : memref<1x2048xf32, #tpu.memory_space<vmem>>, vector<1x2048xf32>
    tpu.vector_store %arg2[%c0_1, %c0_2], %0 {strides = array<i32>} : memref<1x2048xf32, #tpu.memory_space<vmem>>, vector<1x2048xf32>,
    return
  }
  func.func @transform_0(%arg0: i32) -> (i32, i32) {
    %c0_i32 = arith.constant 0 : i32
    %c0_i32_0 = arith.constant 0 : i32
    return %arg0, %c0_i32 : i32, i32
  }
  func.func @transform_1(%arg0: i32) -> (i32, i32) {
    %c0_i32 = arith.constant 0 : i32
    %c0_i32_0 = arith.constant 0 : i32
    return %arg0, %c0_i32 : i32, i32
  }
}

</mosaic_0001>

<llo_original>
// kernel: tpu_custom_call.1
$region0: #{tpu_custom_call.1}
  #allocation0 [shape = 'u32[]', space=smem, size = 0x4, offset = 0x4, fixed_abs, tag = 'smem constant byte address 0x4 - core index']
  #allocation1 [shape = 'u32[72,128]{1,0:T(1,128)}', space=vmem, size = 0x9000, scoped, tag = 'internal scratch']
  %s0 = inlined_call_operand.hbm [shape: f32[1,2048], index: 0, kind: input, shape index: {}]
  %s1 = inlined_call_operand.hbm [shape: f32[1,2048], index: 1, kind: output, shape index: {}]
  %s2 = sld [smem:[#allocation0]]
  $region18: #{tpu_custom_call.1} parent=0
    _
  %s4 = ssub.s32 1, %s2
  %s5 = scalar_select 0, %s4, %s2
  $region1: #{tpu_custom_call.1} parent=0
    #allocation2 [shape = 'u8[8192]{0}', space=vmem, size = 0x2000, scoped, tag = 'input window, operand 0, single buffered']
    #allocation3 [shape = 's32[1]{0}', space=sflag, size = 0x4, scoped, tag = 'scoped memory for tpu_custom_call.1']
    #allocation4 [shape = 's32[1]{0}', space=sflag, size = 0x4, scoped, tag = 'scoped memory for tpu_custom_call.1']
    #allocation5 [shape = 'u8[8192]{0}', space=vmem, size = 0x2000, scoped, tag = 'output window, operand 0, single buffered']
    %6 = vsyncpa [#allocation3], 0
    %7 = vsyncpa [#allocation4], 0
    // Predicated region
    $region2: #{tpu_custom_call.1} parent=1 // pred_check
      _
    $region3: #{tpu_custom_call.1} parent=1 // pred_check_branch
      %9 = sbr.rel (0) target = $region5
    $region4: #{tpu_custom_call.1} parent=1 // pred_region
      %11 = vsyncadd [#allocation3], 0
      %s13 = sshll.u32 %s0, 4
      %s14 = int_to_ptr.hbm [resolvable:$true] %s13
      %s15 = sshll.u32 [#allocation2], 4
      %s16 = int_to_ptr.vmem [resolvable:$true] %s15
      %18 = dma.hbm_to_vmem [thread:$0]  %s14, 256, %s16, [#allocation3]
    $region5: #{tpu_custom_call.1} parent=1 // pred_fallthru
      _
    // Predicated region
    $region6: #{tpu_custom_call.1} parent=1 // pred_check
      _
    $region7: #{tpu_custom_call.1} parent=1 // pred_check_branch
      %20 = sbr.rel (0) target = $region9
    $region8: #{tpu_custom_call.1} parent=1 // pred_region
      %22 = dma.done [#allocation3], 256
    $region9: #{tpu_custom_call.1} parent=1 // pred_fallthru
      _
    %v23 = vld [vmem:[#allocation2] sm:$0xff]
    %v24 = vld [vmem:[#allocation2 + $0x8] sm:$0xff]
    %25 = vst [vmem:[#allocation5] sm:$0xff] %v23
    %26 = vst [vmem:[#allocation5 + $0x8] sm:$0xff] %v24
    // Predicated region
    $region10: #{tpu_custom_call.1} parent=1 // pred_check
      _
    $region11: #{tpu_custom_call.1} parent=1 // pred_check_branch
      %28 = sbr.rel (0) target = $region13
    $region12: #{tpu_custom_call.1} parent=1 // pred_region
      %30 = vsyncadd [#allocation4], 0
      %s32 = sshll.u32 [#allocation5], 4
      %s33 = int_to_ptr.vmem [resolvable:$true] %s32
      %s34 = sshll.u32 %s1, 4
      %s35 = int_to_ptr.hbm [resolvable:$true] %s34
      %37 = dma.vmem_to_hbm [thread:$0]  %s33, 256, %s35, [#allocation4]
    $region13: #{tpu_custom_call.1} parent=1 // pred_fallthru
      _
    // Predicated region
    $region14: #{tpu_custom_call.1} parent=1 // pred_check
      _
    $region15: #{tpu_custom_call.1} parent=1 // pred_check_branch
      %39 = sbr.rel (0) target = $region17
    $region16: #{tpu_custom_call.1} parent=1 // pred_region
      %41 = dma.done [#allocation4], 256
    $region17: #{tpu_custom_call.1} parent=1 // pred_fallthru
      _
    %42 = vsyncpa [#allocation3], 1
    %43 = vsyncpa [#allocation4], 1

</llo_original>
